<compile_context>
chip_gen: v5e
topology: v5e:2x2
jax: 0.10.0
libtpu: 0.0.40
codegen_flags: <defaults>
</compile_context>

<pallas_src>
import jax
import jax.numpy as jnp
from jax.experimental import pallas as pl
from jax.experimental.pallas import tpu as pltpu

_VMEM = pltpu.MemorySpace.VMEM
_HP = jax.lax.Precision.HIGHEST  # reference-side matmul precision only


def _vmem_spec():
    return pl.BlockSpec(memory_space=_VMEM)


# ---------------------------------------------------------------------------
# Fused Augment.forward (case='nlc') kernel
# ---------------------------------------------------------------------------
def _augment_step_kernel(x_ref, ex_ref, at_ref, tgt_ref,
                         w1_ref, b1_ref, w2_ref, b2_ref, w3_ref, o_ref):
    """One fused ODE-step forward.

    x_ref, ex_ref, tgt_ref: (1, dim);  at_ref: (dim, dim) holding A.T.
    o_ref: (2, dim) with row 0 = dx and row 1 = -dx.
    """
    x = x_ref[...]                      # (1, dim)
    g = x * x
    g = g / (1.0 + g)                   # x^2 / (1 + x^2)

    # -B*x + (A @ g_col).T  ==  g_row @ A.T - x      (B = 1.0)
    dx = jnp.dot(g, at_ref[...], preferred_element_type=jnp.float32) - x

    # Control MLP on [x + e_x ; target] stacked -> one MXU push per layer.
    row = jax.lax.broadcasted_iota(jnp.int32, (2, o_ref.shape[1]), 0)
    inp = jnp.where(row == 0, x + ex_ref[...], tgt_ref[...])          # (2, dim)
    h1 = jnp.tanh(jnp.dot(inp, w1_ref[...],
                          preferred_element_type=jnp.float32) + b1_ref[...])
    h2 = jnp.tanh(jnp.dot(h1, w2_ref[...],
                          preferred_element_type=jnp.float32) + b2_ref[...])
    z = jnp.dot(h2, w3_ref[...], preferred_element_type=jnp.float32)  # (2, dim)
    # u = net(x+e_x) - net(target); b3 cancels exactly.  Signed sublane reduce
    # (XLU) avoids unaligned sublane slicing.
    u = jnp.sum(jnp.where(row == 0, z, -z), axis=0, keepdims=True)    # (1, dim)

    dx = dx + u * g
    o_ref[...] = jnp.where(row == 0, dx, -dx).astype(o_ref.dtype)


def augment_forward(x, e_x, A, target_vec, params):
    """Fused Augment.forward (case='nlc').

    x, e_x:     (dim,) float32 state / measurement-error state
    A:          (dim, dim) float32 coupling matrix
    target_vec: (1, dim) float32 (the `self.target` buffer)
    params:     control-net params in (in, out) layout (b3 unused: cancels)
    returns:    (2, dim) float32 -> row 0 = dx, row 1 = -dx
    """
    dim = x.shape[-1]
    xr = x.reshape(1, dim).astype(jnp.float32)
    er = e_x.reshape(1, dim).astype(jnp.float32)
    a_t = jnp.transpose(A).astype(jnp.float32)   # kernel computes g @ A.T
    return pl.pallas_call(
        _augment_step_kernel,
        out_shape=jax.ShapeDtypeStruct((2, dim), jnp.float32),
        in_specs=[_vmem_spec() for _ in range(9)],
        out_specs=_vmem_spec(),
    )(xr, er, a_t, target_vec,
      params["w1"], params["b1"], params["w2"], params["b2"], params["w3"])


# ---------------------------------------------------------------------------
# Batched ControlNLCNet: net(x) - net(target)
# ---------------------------------------------------------------------------
def _stacked_mlp_diff_kernel(xs_ref, w1_ref, b1_ref, w2_ref, b2_ref, w3_ref,
                             o_ref):
    """net(x) - net(target) with x and the single target row stacked.

    xs_ref: (B + 1, n_in); the last row is the target.  All three layers run
    once on the stacked operand; b3 is omitted because it cancels exactly.
    """
    xs = xs_ref[...]
    h1 = jnp.tanh(jnp.dot(xs, w1_ref[...],
                          preferred_element_type=jnp.float32) + b1_ref[...])
    h2 = jnp.tanh(jnp.dot(h1, w2_ref[...],
                          preferred_element_type=jnp.float32) + b2_ref[...])
    z = jnp.dot(h2, w3_ref[...], preferred_element_type=jnp.float32)  # (B+1, out)
    b = o_ref.shape[0]
    o_ref[...] = (z[:b, :] - z[b:b + 1, :]).astype(o_ref.dtype)


def _tiled_mlp_diff_kernel(x_ref, t_ref, w1_ref, b1_ref, w2_ref, b2_ref,
                           w3_ref, o_ref):
    """Gridded variant: one batch tile per grid step; target is a single row
    (its 1-row pass is negligible next to the tile, so it is recomputed)."""
    def feats(inp):   # layers 1-3 without b3 (cancels in the difference)
        h1 = jnp.tanh(jnp.dot(inp, w1_ref[...],
                              preferred_element_type=jnp.float32) + b1_ref[...])
        h2 = jnp.tanh(jnp.dot(h1, w2_ref[...],
                              preferred_element_type=jnp.float32) + b2_ref[...])
        return jnp.dot(h2, w3_ref[...], preferred_element_type=jnp.float32)

    o_ref[...] = (feats(x_ref[...]) - feats(t_ref[...])).astype(o_ref.dtype)


def control_nlc_net_forward(x, target_vec, params, *, tile_b=None):
    """ControlNLCNet.forward for a batch of states.

    x:          (B, n_input) float32
    target_vec: (1, n_input) float32
    params:     w1 (n_in,n_h), b1 (1,n_h), w2 (n_h,n_h), b2 (1,n_h),
                w3 (n_h,n_out)  [(in, out) layout; b3 unused: cancels]
    tile_b:     optional batch tile; if given and B > tile_b, a gridded,
                pipelined kernel is used (tile_b | B, multiple of 8).
    """
    B, n_in = x.shape
    n_h = params["w1"].shape[1]
    n_out = params["w3"].shape[1]

    if tile_b is None or B <= tile_b:
        # Small/medium B: single invocation, everything VMEM-resident.
        stacked = jnp.concatenate([x, target_vec], axis=0)   # (B+1, n_in)
        return pl.pallas_call(
            _stacked_mlp_diff_kernel,
            out_shape=jax.ShapeDtypeStruct((B, n_out), jnp.float32),
            in_specs=[_vmem_spec() for _ in range(6)],
            out_specs=_vmem_spec(),
        )(stacked,
          params["w1"], params["b1"],
          params["w2"], params["b2"],
          params["w3"])

    if B % tile_b != 0 or tile_b % 8 != 0:
        raise ValueError("tile_b must divide B and be a multiple of 8")

    # Large-B path: pipeline batch tiles; weights stay resident via constant
    # index maps; "parallel" lets Mosaic shard the grid across TensorCores.
    # TODO(synk): for a real large-B / large-n_out workload, pad the output
    # slab to a multiple of 128 lanes and feed the MXU bf16 inputs.
    return pl.pallas_call(
        _tiled_mlp_diff_kernel,
        out_shape=jax.ShapeDtypeStruct((B, n_out), jnp.float32),
        grid_spec=pltpu.PrefetchScalarGridSpec(
            num_scalar_prefetch=0,
            grid=(B // tile_b,),
            in_specs=[
                pl.BlockSpec((tile_b, n_in), lambda i: (i, 0)),   # x tiles
                pl.BlockSpec((1, n_in), lambda i: (0, 0)),        # target row
                pl.BlockSpec((n_in, n_h), lambda i: (0, 0)),      # w1 (resident)
                pl.BlockSpec((1, n_h), lambda i: (0, 0)),         # b1
                pl.BlockSpec((n_h, n_h), lambda i: (0, 0)),       # w2
                pl.BlockSpec((1, n_h), lambda i: (0, 0)),         # b2
                pl.BlockSpec((n_h, n_out), lambda i: (0, 0)),     # w3
            ],
            out_specs=pl.BlockSpec((tile_b, n_out), lambda i: (i, 0)),
        ),
        compiler_params=pltpu.CompilerParams(
            dimension_semantics=("parallel",)),
    )(x, target_vec,
      params["w1"], params["b1"],
      params["w2"], params["b2"],
      params["w3"])


# ---------------------------------------------------------------------------
# Synthetic params / references / demo
# ---------------------------------------------------------------------------
def _init_params(key, n_input, n_hidden, n_output):
    """Deterministic synthetic init (PyTorch Linear-style uniform bounds)."""
    ks = jax.random.split(key, 6)

    def linear(kw, kb, fan_in, fan_out):
        bound = 1.0 / jnp.sqrt(fan_in)
        # stored as (in, out) so the kernel computes x @ W + b
        w = jax.random.uniform(kw, (fan_in, fan_out), jnp.float32, -bound, bound)
        b = jax.random.uniform(kb, (1, fan_out), jnp.float32, -bound, bound)
        return w, b

    w1, b1 = linear(ks[0], ks[1], n_input, n_hidden)
    w2, b2 = linear(ks[2], ks[3], n_hidden, n_hidden)
    w3, b3 = linear(ks[4], ks[5], n_hidden, n_output)
    return dict(w1=w1, b1=b1, w2=w2, b2=b2, w3=w3, b3=b3)


if __name__ == "__main__":
    # Small shapes consistent with the module (dim = n_input = n_output).
    dim, n_hidden = 8, 32

    key = jax.random.PRNGKey(0)
    k_x, k_e, k_t, k_A, k_p, kb1, kb2 = jax.random.split(key, 7)

    x_state = jax.random.normal(k_x, (dim,), jnp.float32)
    e_state = 0.1 * jax.random.normal(k_e, (dim,), jnp.float32)
    # synthetic stand-ins for ./data/target_100.npy and ./data/A_100.npy
    target_vec = jax.random.normal(k_t, (1, dim), jnp.float32)
    A = jax.random.normal(k_A, (dim, dim), jnp.float32) / jnp.sqrt(dim)

    params = _init_params(k_p, dim, n_hidden, dim)

    # Pure-JAX reference (with b3, i.e. exact PyTorch semantics; HIGHEST-precision dots).
    def ref_net(inp):
        h1 = jnp.tanh(jnp.dot(inp, params["w1"], precision=_HP) + params["b1"])
        h2 = jnp.tanh(jnp.dot(h1, params["w2"], precision=_HP) + params["b2"])
        return jnp.dot(h2, params["w3"], precision=_HP) + params["b3"]

    # --- fused Augment.forward (case='nlc') ---
    out = augment_forward(x_state, e_state, A, target_vec, params)
    jax.block_until_ready(out)
    g = x_state ** 2 / (1.0 + x_state ** 2)
    dx_ref = (-1.0 * x_state
              + jnp.dot(A, g.reshape(dim, 1), precision=_HP).reshape(dim))
    u_ref = (ref_net((x_state + e_state).reshape(1, dim))
             - ref_net(target_vec))[0]
    dx_ref = dx_ref + u_ref * g
    ref_aug = jnp.stack([dx_ref, -dx_ref], axis=0)
    assert out.shape == (2, dim)
    assert jnp.allclose(out, ref_aug, atol=5e-3, rtol=5e-3)

    # --- batched control net, single-call stacked path (B = 2) ---
    B = 2
    xb = jax.random.normal(kb1, (B, dim), jnp.float32)
    out_c = control_nlc_net_forward(xb, target_vec, params)
    jax.block_until_ready(out_c)
    ref_c = ref_net(xb) - ref_net(jnp.broadcast_to(target_vec, (B, dim)))
    assert out_c.shape == (B, dim)
    assert jnp.allclose(out_c, ref_c, atol=5e-3, rtol=5e-3)

    # --- batched control net, gridded large-B path ---
    B2, tile_b = 16, 8
    xb2 = jax.random.normal(kb2, (B2, dim), jnp.float32)
    out_c2 = control_nlc_net_forward(xb2, target_vec, params, tile_b=tile_b)
    jax.block_until_ready(out_c2)
    ref_c2 = ref_net(xb2) - ref_net(jnp.broadcast_to(target_vec, (B2, dim)))
    assert out_c2.shape == (B2, dim)
    assert jnp.allclose(out_c2, ref_c2, atol=5e-3, rtol=5e-3)

    print("KERNEL_OK")
</pallas_src>

<mosaic_0001>
module attributes {stable_mosaic.version = 11 : i64} {
  func.func @_augment_step_kernel(%arg0: memref<1x8xf32, #tpu.memory_space<vmem>>, %arg1: memref<1x8xf32, #tpu.memory_space<vmem>>, %arg2: memref<8x8xf32, #tpu.memory_space<vmem>>, %arg3: memref<1x8xf32, #tpu.memory_space<vmem>>, %arg4: memref<8x32xf32, #tpu.memory_space<vmem>>, %arg5: memref<1x32xf32, #tpu.memory_space<vmem>>, %arg6: memref<32x32xf32, #tpu.memory_space<vmem>>, %arg7: memref<1x32xf32, #tpu.memory_space<vmem>>, %arg8: memref<32x8xf32, #tpu.memory_space<vmem>>, %arg9: memref<2x8xf32, #tpu.memory_space<vmem>>) attributes {dimension_semantics = [], scalar_prefetch = 0 : i64, scratch_operands = 0 : i64, tpu.core_type = #tpu.core_type<tc>} {
    %c0 = arith.constant 0 : index
    %c0_0 = arith.constant 0 : index
    %0 = vector.load %arg0[%c0, %c0_0] : memref<1x8xf32, #tpu.memory_space<vmem>>, vector<1x8xf32>
    %1 = arith.mulf %0, %0 : vector<1x8xf32>
    %cst = arith.constant 1.000000e+00 : f32
    %2 = vector.broadcast %cst : f32 to vector<1x8xf32>
    %3 = arith.addf %2, %1 : vector<1x8xf32>
    %4 = arith.divf %1, %3 : vector<1x8xf32>
    %c0_1 = arith.constant 0 : index
    %c0_2 = arith.constant 0 : index
    %5 = vector.load %arg2[%c0_1, %c0_2] : memref<8x8xf32, #tpu.memory_space<vmem>>, vector<8x8xf32>
    %cst_3 = arith.constant dense<0.000000e+00> : vector<1x8xf32>
    %6 = tpu.matmul %4, %5, %cst_3 {dimension_numbers = #tpu.dot_dimension_numbers<[1], [0], [0], [1], [0, 0, 1, 1], [], []>} : vector<1x8xf32>, vector<8x8xf32>, vector<1x8xf32> -> vector<1x8xf32>
    %7 = arith.subf %6, %0 : vector<1x8xf32>
    %8 = tpu.iota {dimensions = array<i32: 0>} : vector<2x8xi32>
    %c0_i32 = arith.constant 0 : i32
    %9 = vector.broadcast %c0_i32 : i32 to vector<2x8xi32>
    %10 = arith.cmpi eq, %8, %9 : vector<2x8xi32>
    %c0_4 = arith.constant 0 : index
    %c0_5 = arith.constant 0 : index
    %11 = vector.load %arg1[%c0_4, %c0_5] : memref<1x8xf32, #tpu.memory_space<vmem>>, vector<1x8xf32>
    %12 = arith.addf %0, %11 : vector<1x8xf32>
    %c0_6 = arith.constant 0 : index
    %c0_7 = arith.constant 0 : index
    %13 = vector.load %arg3[%c0_6, %c0_7] : memref<1x8xf32, #tpu.memory_space<vmem>>, vector<1x8xf32>
    %14 = vector.shape_cast %12 : vector<1x8xf32> to vector<1x8xf32>
    %15 = vector.broadcast %14 : vector<1x8xf32> to vector<2x8xf32>
    %16 = vector.shape_cast %13 : vector<1x8xf32> to vector<1x8xf32>
    %17 = vector.broadcast %16 : vector<1x8xf32> to vector<2x8xf32>
    %18 = arith.select %10, %15, %17 : vector<2x8xi1>, vector<2x8xf32>
    %c0_8 = arith.constant 0 : index
    %c0_9 = arith.constant 0 : index
    %19 = vector.load %arg4[%c0_8, %c0_9] : memref<8x32xf32, #tpu.memory_space<vmem>>, vector<8x32xf32>
    %cst_10 = arith.constant dense<0.000000e+00> : vector<2x32xf32>
    %20 = tpu.matmul %18, %19, %cst_10 {dimension_numbers = #tpu.dot_dimension_numbers<[1], [0], [0], [1], [0, 0, 1, 1], [], []>} : vector<2x8xf32>, vector<8x32xf32>, vector<2x32xf32> -> vector<2x32xf32>
    %c0_11 = arith.constant 0 : index
    %c0_12 = arith.constant 0 : index
    %21 = vector.load %arg5[%c0_11, %c0_12] : memref<1x32xf32, #tpu.memory_space<vmem>>, vector<1x32xf32>
    %22 = vector.broadcast %21 : vector<1x32xf32> to vector<2x32xf32>
    %23 = arith.addf %20, %22 : vector<2x32xf32>
    %24 = math.tanh %23 : vector<2x32xf32>
    %c0_13 = arith.constant 0 : index
    %c0_14 = arith.constant 0 : index
    %25 = vector.load %arg6[%c0_13, %c0_14] : memref<32x32xf32, #tpu.memory_space<vmem>>, vector<32x32xf32>
    %cst_15 = arith.constant dense<0.000000e+00> : vector<2x32xf32>
    %26 = tpu.matmul %24, %25, %cst_15 {dimension_numbers = #tpu.dot_dimension_numbers<[1], [0], [0], [1], [0, 0, 1, 1], [], []>} : vector<2x32xf32>, vector<32x32xf32>, vector<2x32xf32> -> vector<2x32xf32>
    %c0_16 = arith.constant 0 : index
    %c0_17 = arith.constant 0 : index
    %27 = vector.load %arg7[%c0_16, %c0_17] : memref<1x32xf32, #tpu.memory_space<vmem>>, vector<1x32xf32>
    %28 = vector.broadcast %27 : vector<1x32xf32> to vector<2x32xf32>
    %29 = arith.addf %26, %28 : vector<2x32xf32>
    %30 = math.tanh %29 : vector<2x32xf32>
    %c0_18 = arith.constant 0 : index
    %c0_19 = arith.constant 0 : index
    %31 = vector.load %arg8[%c0_18, %c0_19] : memref<32x8xf32, #tpu.memory_space<vmem>>, vector<32x8xf32>
    %cst_20 = arith.constant dense<0.000000e+00> : vector<2x8xf32>
    %32 = tpu.matmul %30, %31, %cst_20 {dimension_numbers = #tpu.dot_dimension_numbers<[1], [0], [0], [1], [0, 0, 1, 1], [], []>} : vector<2x32xf32>, vector<32x8xf32>, vector<2x8xf32> -> vector<2x8xf32>
    %c0_i32_21 = arith.constant 0 : i32
    %33 = vector.broadcast %c0_i32_21 : i32 to vector<2x8xi32>
    %34 = arith.cmpi eq, %8, %33 : vector<2x8xi32>
    %cst_22 = arith.constant 0.000000e+00 : f32
    %35 = vector.broadcast %cst_22 : f32 to vector<2x8xf32>
    %36 = arith.subf %35, %32 : vector<2x8xf32>
    %37 = arith.select %34, %32, %36 : vector<2x8xi1>, vector<2x8xf32>
    %cst_23 = arith.constant dense<0.000000e+00> : vector<8xf32>
    %38 = vector.multi_reduction <add>, %37, %cst_23 [0] : vector<2x8xf32> to vector<8xf32>
    %39 = vector.shape_cast %38 : vector<8xf32> to vector<1x8xf32>
    %40 = arith.mulf %39, %4 : vector<1x8xf32>
    %41 = arith.addf %7, %40 : vector<1x8xf32>
    %c0_i32_24 = arith.constant 0 : i32
    %42 = vector.broadcast %c0_i32_24 : i32 to vector<2x8xi32>
    %43 = arith.cmpi eq, %8, %42 : vector<2x8xi32>
    %cst_25 = arith.constant 0.000000e+00 : f32
    %44 = vector.broadcast %cst_25 : f32 to vector<1x8xf32>
    %45 = arith.subf %44, %41 : vector<1x8xf32>
    %46 = vector.shape_cast %41 : vector<1x8xf32> to vector<1x8xf32>
    %47 = vector.broadcast %46 : vector<1x8xf32> to vector<2x8xf32>
    %48 = vector.shape_cast %45 : vector<1x8xf32> to vector<1x8xf32>
    %49 = vector.broadcast %48 : vector<1x8xf32> to vector<2x8xf32>
    %50 = arith.select %43, %47, %49 : vector<2x8xi1>, vector<2x8xf32>
    %c0_26 = arith.constant 0 : index
    %c0_27 = arith.constant 0 : index
    %51 = vector.load %arg9[%c0_26, %c0_27] : memref<2x8xf32, #tpu.memory_space<vmem>>, vector<2x8xf32>
    tpu.vector_store %arg9[%c0_26, %c0_27], %50 {strides = array<i32>} : memref<2x8xf32, #tpu.memory_space<vmem>>, vector<2x8xf32>,
    return
  }
}

</mosaic_0001>

<llo_original>
// kernel: tpu_custom_call.1
$region0: #{tpu_custom_call.1}
  #allocation0 [shape = 'u32[]', space=smem, size = 0x4, offset = 0x4, fixed_abs, tag = 'smem constant byte address 0x4 - core index']
  #allocation1 [shape = 'u32[72,128]{1,0:T(1,128)}', space=vmem, size = 0x9000, scoped, tag = 'internal scratch']
  %s0 = inlined_call_operand.vmem [shape: f32[1,8], index: 0, kind: input, shape index: {}]
  %s1 = inlined_call_operand.vmem [shape: f32[1,8], index: 1, kind: input, shape index: {}]
  %s2 = inlined_call_operand.vmem [shape: f32[8,8], index: 2, kind: input, shape index: {}]
  %s3 = inlined_call_operand.vmem [shape: f32[1,8], index: 3, kind: input, shape index: {}]
  %s4 = inlined_call_operand.hbm [shape: f32[8,32], index: 4, kind: input, shape index: {}]
  %s5 = inlined_call_operand.vmem [shape: f32[1,32], index: 5, kind: input, shape index: {}]
  %s6 = inlined_call_operand.vmem [shape: f32[32,32], index: 6, kind: input, shape index: {}]
  %s7 = inlined_call_operand.vmem [shape: f32[1,32], index: 7, kind: input, shape index: {}]
  %s8 = inlined_call_operand.vmem [shape: f32[32,8], index: 8, kind: input, shape index: {}]
  %s9 = inlined_call_operand.hbm [shape: f32[2,8], index: 9, kind: output, shape index: {}]
  %s10 = sld [smem:[#allocation0]]
  $region50: #{tpu_custom_call.1} parent=0
    _
  %s12 = ssub.s32 1, %s10
  %s13 = scalar_select 0, %s12, %s10
  $region1: #{tpu_custom_call.1} parent=0
    #allocation2 [shape = 'u8[4096]{0}', space=vmem, size = 0x1000, scoped, tag = 'input window, operand 4, single buffered']
    #allocation3 [shape = 's32[1]{0}', space=sflag, size = 0x4, scoped, tag = 'scoped memory for tpu_custom_call.1']
    #allocation4 [shape = 's32[1]{0}', space=sflag, size = 0x4, scoped, tag = 'scoped memory for tpu_custom_call.1']
    #allocation5 [shape = 'u8[1024]{0}', space=vmem, size = 0x400, scoped, tag = 'output window, operand 0, single buffered']
    %14 = vsyncpa [#allocation3], 0
    %15 = vsyncpa [#allocation4], 0
    // Predicated region
    $region2: #{tpu_custom_call.1} parent=1 // pred_check
      _
    $region3: #{tpu_custom_call.1} parent=1 // pred_check_branch
      %17 = sbr.rel (0) target = $region5
    $region4: #{tpu_custom_call.1} parent=1 // pred_region
      _
    $region5: #{tpu_custom_call.1} parent=1 // pred_fallthru
      _
    // Predicated region
    $region6: #{tpu_custom_call.1} parent=1 // pred_check
      _
    $region7: #{tpu_custom_call.1} parent=1 // pred_check_branch
      %19 = sbr.rel (0) target = $region9
    $region8: #{tpu_custom_call.1} parent=1 // pred_region
      _
    $region9: #{tpu_custom_call.1} parent=1 // pred_fallthru
      _
    // Predicated region
    $region10: #{tpu_custom_call.1} parent=1 // pred_check
      _
    $region11: #{tpu_custom_call.1} parent=1 // pred_check_branch
      %21 = sbr.rel (0) target = $region13
    $region12: #{tpu_custom_call.1} parent=1 // pred_region
      _
    $region13: #{tpu_custom_call.1} parent=1 // pred_fallthru
      _
    // Predicated region
    $region14: #{tpu_custom_call.1} parent=1 // pred_check
      _
    $region15: #{tpu_custom_call.1} parent=1 // pred_check_branch
      %23 = sbr.rel (0) target = $region17
    $region16: #{tpu_custom_call.1} parent=1 // pred_region
      _
    $region17: #{tpu_custom_call.1} parent=1 // pred_fallthru
      _
    // Predicated region
    $region18: #{tpu_custom_call.1} parent=1 // pred_check
      _
    $region19: #{tpu_custom_call.1} parent=1 // pred_check_branch
      %25 = sbr.rel (0) target = $region21
    $region20: #{tpu_custom_call.1} parent=1 // pred_region
      %27 = vsyncadd [#allocation3], 0
      %s29 = sshll.u32 %s4, 4
      %s30 = int_to_ptr.hbm [resolvable:$true] %s29
      %s31 = sshll.u32 [#allocation2], 4
      %s32 = int_to_ptr.vmem [resolvable:$true] %s31
      %34 = dma.hbm_to_vmem [thread:$0]  %s30, 128, %s32, [#allocation3]
    $region21: #{tpu_custom_call.1} parent=1 // pred_fallthru
      _
    // Predicated region
    $region22: #{tpu_custom_call.1} parent=1 // pred_check
      _
    $region23: #{tpu_custom_call.1} parent=1 // pred_check_branch
      %36 = sbr.rel (0) target = $region25
    $region24: #{tpu_custom_call.1} parent=1 // pred_region
      _
    $region25: #{tpu_custom_call.1} parent=1 // pred_fallthru
      _
    // Predicated region
    $region26: #{tpu_custom_call.1} parent=1 // pred_check
      _
    $region27: #{tpu_custom_call.1} parent=1 // pred_check_branch
      %38 = sbr.rel (0) target = $region29
    $region28: #{tpu_custom_call.1} parent=1 // pred_region
      _
    $region29: #{tpu_custom_call.1} parent=1 // pred_fallthru
      _
    // Predicated region
    $region30: #{tpu_custom_call.1} parent=1 // pred_check
      _
    $region31: #{tpu_custom_call.1} parent=1 // pred_check_branch
      %40 = sbr.rel (0) target = $region33
    $region32: #{tpu_custom_call.1} parent=1 // pred_region
      _
    $region33: #{tpu_custom_call.1} parent=1 // pred_fallthru
      _
    // Predicated region
    $region34: #{tpu_custom_call.1} parent=1 // pred_check
      _
    $region35: #{tpu_custom_call.1} parent=1 // pred_check_branch
      %42 = sbr.rel (0) target = $region37
    $region36: #{tpu_custom_call.1} parent=1 // pred_region
      _
    $region37: #{tpu_custom_call.1} parent=1 // pred_fallthru
      _
    // Predicated region
    $region38: #{tpu_custom_call.1} parent=1 // pred_check
      _
    $region39: #{tpu_custom_call.1} parent=1 // pred_check_branch
      %44 = sbr.rel (0) target = $region41
    $region40: #{tpu_custom_call.1} parent=1 // pred_region
      %46 = dma.done [#allocation3], 128
    $region41: #{tpu_custom_call.1} parent=1 // pred_fallthru
      _
    %v47 = vld [vmem:[%s0] sm:$0x1]
    %v48 = vmul.f32 %v47, %v47
    %v49 = vadd.f32 %v48, 1.0
    %v50 = vrcp.pop %v49
    %v51 = vmul.f32 %v49, %v50
    %v52 = vsub.f32 1.0, %v51
    %v53 = vmul.f32 %v50, %v52
    %v54 = vadd.f32 %v50, %v53
    %vm55 = vweird.f32 %v49
    %vm56 = vweird.f32 %v50
    %vm57 = vmor %vm55, %vm56
    %v58 = vsel %vm57, %v50, %v54
    %v59 = vand.u32 2147483647, %v49
    %vm60 = vcmp.eq.f32.partialorder %v59, 8.507059e+37
    %v61 = vand.u32 %v49, 2147483648
    %v62 = vor.u32 1.1754944e-38, %v61
    %v63 = vsel %vm60, %v62, %v58
    %v64 = vmul.f32 %v48, %v63
    %v65 = vld [vmem:[%s2] sm:$0xff]
    %vm66 = vcmask 64512
    %v68 = vsel %vm66, %v64, 0
    %70 = vmatpush.msra.mxu0 0.0
    %71 = vmatpush.msra.mxu0 0.0
    %72 = vmatpush.msra.mxu0 0.0
    %73 = vmatpush.msra.mxu0 0.0
    %74 = vmatpush.msra.mxu0 0.0
    %75 = vmatpush.msra.mxu0 0.0
    %76 = vmatpush.msra.mxu0 0.0
    %77 = vmatpush.msra.mxu0 0.0
    %78 = vmatpush.msra.mxu0 0.0
    %79 = vmatpush.msra.mxu0 0.0
    %80 = vmatpush.msra.mxu0 0.0
    %81 = vmatpush.msra.mxu0 0.0
    %82 = vmatpush.msra.mxu0 0.0
    %83 = vmatpush.msra.mxu0 0.0
    %84 = vmatpush.msra.mxu0 0.0
    %85 = vmatpush.msra.mxu0 %v65
    %86 = vmatmul.f32.gmra.mxu0 %v68
    %v87 = vpop.f32.mrf.mxu0
    %v88 = vadd.f32 0.0, %v87
    %89 = vdwg.mxu0
    %v90 = vsub.f32 %v88, %v47
    %v91 = vlaneseq
    %v92 = vshrl.u32 %v91, 7
    %vm93 = vcmp.eq.s32.totalorder %v92, 0
    %v94 = vld [vmem:[%s1] sm:$0x1]
    %v95 = vadd.f32 %v47, %v94
    %v96 = vld [vmem:[%s3] sm:$0x1]
    %v98 = vperm.slane %v95, 0
    %v101 = vperm.slane %v96, 0
    %v103 = vsel %vm93, %v98, %v101
    %v104 = vld [vmem:[#allocation2] sm:$0xff]
    %v105 = vld [vmem:[%s5] sm:$0x1]
    %v107 = vperm.slane %v105, 0
    %v110 = vsel %vm66, %v103, 0
    %112 = vmatpush.msra.mxu0 0.0
    %113 = vmatpush.msra.mxu0 0.0
    %114 = vmatpush.msra.mxu0 0.0
    %115 = vmatpush.msra.mxu0 0.0
    %116 = vmatpush.msra.mxu0 0.0
    %117 = vmatpush.msra.mxu0 0.0
    %118 = vmatpush.msra.mxu0 0.0
    %119 = vmatpush.msra.mxu0 0.0
    %120 = vmatpush.msra.mxu0 0.0
    %121 = vmatpush.msra.mxu0 0.0
    %122 = vmatpush.msra.mxu0 0.0
    %123 = vmatpush.msra.mxu0 0.0
    %124 = vmatpush.msra.mxu0 0.0
    %125 = vmatpush.msra.mxu0 0.0
    %126 = vmatpush.msra.mxu0 0.0
    %127 = vmatpush.msra.mxu0 %v104
    %128 = vmatmul.f32.gmra.mxu0 %v110
    %v129 = vpop.f32.mrf.mxu0
    %v130 = vadd.f32 %v107, %v129
    %131 = vdwg.mxu0
    %v132 = vtanh.pop %v130
    %v133 = vld [vmem:[%s6] sm:$0xff]
    %v134 = vld [vmem:[%s6 + $0x8] sm:$0xff]
    %v135 = vld [vmem:[%s6 + $0x10] sm:$0xff]
    %v136 = vld [vmem:[%s6 + $0x18] sm:$0xff]
    %v137 = vld [vmem:[%s7] sm:$0x1]
    %v139 = vperm.slane %v137, 0
    %vm141 = vcmask 261120
    %v143 = vsel %vm141, %v132, 0
    %145 = vmatpush.msra.mxu0 0.0
    %146 = vmatpush.msra.mxu0 0.0
    %147 = vmatpush.msra.mxu0 0.0
    %148 = vmatpush.msra.mxu0 0.0
    %149 = vmatpush.msra.mxu0 0.0
    %150 = vmatpush.msra.mxu0 0.0
    %151 = vmatpush.msra.mxu0 0.0
    %152 = vmatpush.msra.mxu0 0.0
    %153 = vmatpush.msra.mxu0 0.0
    %154 = vmatpush.msra.mxu0 0.0
    %155 = vmatpush.msra.mxu0 0.0
    %156 = vmatpush.msra.mxu0 0.0
    %157 = vmatpush.msra.mxu0 %v136
    %158 = vmatpush.msra.mxu0 %v135
    %159 = vmatpush.msra.mxu0 %v134
    %160 = vmatpush.msra.mxu0 %v133
    %161 = vmatmul.f32.gmra.mxu0 %v143
    %v162 = vpop.f32.mrf.mxu0
    %v163 = vadd.f32 %v139, %v162
    %164 = vdwg.mxu0
    %v165 = vtanh.pop %v163
    %v166 = vld [vmem:[%s8] sm:$0xff]
    %v167 = vld [vmem:[%s8 + $0x8] sm:$0xff]
    %v168 = vld [vmem:[%s8 + $0x10] sm:$0xff]
    %v169 = vld [vmem:[%s8 + $0x18] sm:$0xff]
    %v171 = vsel %vm141, %v165, 0
    %173 = vmatpush.msra.mxu0 0.0
    %174 = vmatpush.msra.mxu0 0.0
    %175 = vmatpush.msra.mxu0 0.0
    %176 = vmatpush.msra.mxu0 0.0
    %177 = vmatpush.msra.mxu0 0.0
    %178 = vmatpush.msra.mxu0 0.0
    %179 = vmatpush.msra.mxu0 0.0
    %180 = vmatpush.msra.mxu0 0.0
    %181 = vmatpush.msra.mxu0 0.0
    %182 = vmatpush.msra.mxu0 0.0
    %183 = vmatpush.msra.mxu0 0.0
    %184 = vmatpush.msra.mxu0 0.0
    %185 = vmatpush.msra.mxu0 %v169
    %186 = vmatpush.msra.mxu0 %v168
    %187 = vmatpush.msra.mxu0 %v167
    %188 = vmatpush.msra.mxu0 %v166
    %189 = vmatmul.f32.gmra.mxu0 %v171
    %v190 = vpop.f32.mrf.mxu0
    %v191 = vadd.f32 0.0, %v190
    %192 = vdwg.mxu0
    %v193 = vsub.f32 0.0, %v191
    %v194 = vsel %vm93, %v191, %v193
    %vm195 = vcmask 58368
    %v196 = vsel %vm195, %v194, 0.0
    %v197 = vrot.slane %v196, 4
    %v198 = vadd.f32 %v196, %v197
    %v199 = vrot.slane %v198, 2
    %v200 = vadd.f32 %v198, %v199
    %v201 = vrot.slane %v200, 1
    %v202 = vadd.f32 %v200, %v201
    %v203 = vmul.f32 %v202, %v64
    %v204 = vadd.f32 %v90, %v203
    %v205 = vsub.f32 0.0, %v204
    %v206 = vperm.slane %v204, 0
    %v207 = vperm.slane %v205, 0
    %v208 = vsel %vm93, %v206, %v207
    %209 = vst.msk [vmem:[#allocation5] sm:$0x3] %vm195, %v208
    // Predicated region
    $region42: #{tpu_custom_call.1} parent=1 // pred_check
      _
    $region43: #{tpu_custom_call.1} parent=1 // pred_check_branch
      %211 = sbr.rel (0) target = $region45
    $region44: #{tpu_custom_call.1} parent=1 // pred_region
      %213 = vsyncadd [#allocation4], 0
      %s215 = sshll.u32 [#allocation5], 4
      %s216 = int_to_ptr.vmem [resolvable:$true] %s215
      %s217 = sshll.u32 %s9, 4
      %s218 = int_to_ptr.hbm [resolvable:$true] %s217
      %220 = dma.vmem_to_hbm [thread:$0]  %s216, 32, %s218, [#allocation4]
    $region45: #{tpu_custom_call.1} parent=1 // pred_fallthru
      _
    // Predicated region
    $region46: #{tpu_custom_call.1} parent=1 // pred_check
      _
    $region47: #{tpu_custom_call.1} parent=1 // pred_check_branch
      %222 = sbr.rel (0) target = $region49
    $region48: #{tpu_custom_call.1} parent=1 // pred_region
      %224 = dma.done [#allocation4], 32
    $region49: #{tpu_custom_call.1} parent=1 // pred_fallthru
      _
    %225 = vsyncpa [#allocation3], 1
    %226 = vsyncpa [#allocation4], 1

</llo_original>
